<compile_context>
chip_gen: v7x
topology: tpu7x:2x2x1
jax: 0.10.0
libtpu: 0.0.40
codegen_flags: <defaults>
</compile_context>

<pallas_src>
import functools

import jax
import jax.numpy as jnp
from jax import lax
from jax.experimental import pallas as pl
from jax.experimental.pallas import tpu as pltpu


def _basic_conv_kernel(x_ref, w_ref, gamma_ref, beta_ref, mask_ref, o_ref,
                       p_ref, *, N, KH, KW, S, Q, Q_pad, cin, cin_pad,
                       n_valid, eps):
    """Fused Conv(3x3, stride=1) + BatchNorm(batch stats) + ReLU, one step.

    x_ref:     (N, Cin, L)        padded per-image plane flattened to one lane axis
    w_ref:     (Cout, K_pad)      im2col weights, tap blocks padded to 8 sublanes
    gamma_ref: (Cout, 1)          BN weight
    beta_ref:  (Cout, 1)          BN bias
    mask_ref:  (1, N*Q_pad)       1.0 on real output columns, 0.0 on wide/pad columns
    o_ref:     (Cout, N*Q_pad)    lane-dense wide output (pad cols sliced off outside)
    p_ref:     VMEM (K_pad, N*Q_pad)  im2col scratch
    """
    # Zero the scratch once: sublane-pad rows (cin..cin_pad) and lane-pad columns
    # (Q..Q_pad per image) are never overwritten; stale VMEM there (NaN * 0 = NaN)
    # would otherwise poison the BN statistics.
    p_ref[...] = jnp.zeros_like(p_ref)

    # im2col ("wide output" trick): every tap of every image is ONE contiguous lane
    # slice of the flat padded plane at static offset kh*S + kw.  Tap blocks land at
    # 8-sublane-aligned rows, per-image column bases n*Q_pad are 128-lane aligned.
    for n in range(N):
        for kh in range(KH):
            for kw in range(KW):
                t = kh * KW + kw
                off = kh * S + kw
                p_ref[t * cin_pad:t * cin_pad + cin,
                      n * Q_pad:n * Q_pad + Q] = x_ref[n, :, off:off + Q]

    # ONE lane-dense MXU matmul for the whole batch:
    # (Cout, K_pad) @ (K_pad, N*Q_pad) -> (Cout, N*Q_pad), columns multiple of 256.
    conv = jnp.dot(w_ref[...], p_ref[...], preferred_element_type=jnp.float32)

    # BatchNorm, training mode: biased batch variance over (N, Ho, Wo); wide-output
    # wrap columns and lane padding are excluded via the mask (centered two-pass var).
    mask = mask_ref[...]                                           # (1, N*Q_pad)
    inv_cnt = 1.0 / n_valid
    mean = jnp.sum(conv * mask, axis=1, keepdims=True) * inv_cnt   # (Cout, 1)
    d = (conv - mean) * mask
    var = jnp.sum(d * d, axis=1, keepdims=True) * inv_cnt          # (Cout, 1)
    scale = gamma_ref[...] * lax.rsqrt(var + eps)
    shift = beta_ref[...] - mean * scale

    # Single fused scale/shift/ReLU sweep straight into the resident output block.
    o_ref[...] = jnp.maximum(conv * scale + shift, 0.0)


def basic_conv(x_nchw, w_oihw, gamma, beta, padding=1):
    """BasicConv forward: NCHW in / NCHW out (stride=1, dilation=1, groups=1)."""
    N, Cin, H, W = x_nchw.shape
    Cout, _, KH, KW = w_oihw.shape

    Hp, S = H + 2 * padding, W + 2 * padding        # padded spatial extents
    Ho, Wo = Hp - KH + 1, S - KW + 1
    Q = Ho * S                                      # wide-output columns per image
    Q_pad = ((Q + 127) // 128) * 128                # lane-dense per-image block
    TOTAL = N * Q_pad                               # total matmul columns
    L = Hp * S + (KW - 1)                           # flat length (+tail keeps taps in-bounds)
    CIN_PAD = ((Cin + 7) // 8) * 8                  # 8-sublane-aligned tap blocks
    K_pad = KH * KW * CIN_PAD

    # Pad spatially, flatten (H, W) into one lane axis (free, row-major), append
    # KW-1 zeros so the largest tap offset never reads out of bounds.
    x_pad = jnp.pad(x_nchw.astype(jnp.float32),
                    ((0, 0), (0, 0), (padding, padding), (padding, padding)))
    x_flat = jnp.pad(x_pad.reshape(N, Cin, Hp * S), ((0, 0), (0, 0), (0, KW - 1)))

    # im2col weights with Cin padded to 8 per tap: column = (kh*KW + kw)*CIN_PAD + c.
    w_p = jnp.pad(w_oihw.astype(jnp.float32),
                  ((0, 0), (0, CIN_PAD - Cin), (0, 0), (0, 0)))
    w2d = jnp.transpose(w_p, (0, 2, 3, 1)).reshape(Cout, K_pad)

    g2 = gamma.reshape(Cout, 1).astype(jnp.float32)
    b2 = beta.reshape(Cout, 1).astype(jnp.float32)

    # Valid-column mask for the padded wide output (lane-dense: TOTAL % 128 == 0).
    q = jnp.arange(TOTAL, dtype=jnp.int32) % Q_pad
    mask = ((q < Q) & (q % S < Wo)).astype(jnp.float32).reshape(1, TOTAL)

    kernel = functools.partial(
        _basic_conv_kernel, N=N, KH=KH, KW=KW, S=S, Q=Q, Q_pad=Q_pad,
        cin=Cin, cin_pad=CIN_PAD, n_valid=float(N * Ho * Wo), eps=1e-5)

    out_wide = pl.pallas_call(
        kernel,
        out_shape=jax.ShapeDtypeStruct((Cout, TOTAL), jnp.float32),
        grid=(1,),
        in_specs=[
            pl.BlockSpec((N, Cin, L), lambda i: (0, 0, 0)),     # whole padded batch (~10 KiB)
            pl.BlockSpec((Cout, K_pad), lambda i: (0, 0)),      # weights
            pl.BlockSpec((Cout, 1), lambda i: (0, 0)),          # gamma
            pl.BlockSpec((Cout, 1), lambda i: (0, 0)),          # beta
            pl.BlockSpec((1, TOTAL), lambda i: (0, 0)),         # valid-column mask
        ],
        out_specs=pl.BlockSpec((Cout, TOTAL), lambda i: (0, 0)),
        scratch_shapes=[pltpu.VMEM((K_pad, TOTAL), jnp.float32)],   # im2col scratch (~216 KiB)
        compiler_params=pltpu.CompilerParams(
            dimension_semantics=("arbitrary",),
            vmem_limit_bytes=32 * 1024 * 1024,   # safe on v5e/v6e/v7x; usage ≪ 1 MiB
        ),
    )(x_flat, w2d, g2, b2, mask)

    # Undo lane/wide padding: (Cout, N*Q_pad) -> (N, Cout, Ho, Wo).  Tiny output;
    # reshape/slice/transpose is cheap wrapper-side layout plumbing.
    out = out_wide.reshape(Cout, N, Q_pad)[:, :, :Q]
    out = out.reshape(Cout, N, Ho, S)[:, :, :, :Wo]
    return jnp.transpose(out, (1, 0, 2, 3))


def reference(x_nchw, w_oihw, gamma, beta, padding=1):
    """Pure-JAX reference of the same forward (for correctness check)."""
    y = lax.conv_general_dilated(
        x_nchw, w_oihw, window_strides=(1, 1),
        padding=((padding, padding), (padding, padding)),
        dimension_numbers=("NCHW", "OIHW", "NCHW"))
    mean = jnp.mean(y, axis=(0, 2, 3), keepdims=True)
    var = jnp.mean((y - mean) ** 2, axis=(0, 2, 3), keepdims=True)
    yn = (y - mean) * lax.rsqrt(var + 1e-5)
    yn = yn * gamma.reshape(1, -1, 1, 1) + beta.reshape(1, -1, 1, 1)
    return jnp.maximum(yn, 0.0)


if __name__ == "__main__":
    # BasicConv(in_planes=4, out_planes=8, kernel_size=3, stride=1, padding=1,
    #           relu=True, bn=True, bias=False)
    N, Cin, H, W = 2, 4, 16, 16
    Cout, KH, KW = 8, 3, 3

    key = jax.random.PRNGKey(0)
    kx, kw = jax.random.split(key)
    x = jax.random.normal(kx, (N, Cin, H, W), dtype=jnp.float32)
    fan_in = Cin * KH * KW
    w = jax.random.normal(kw, (Cout, Cin, KH, KW), dtype=jnp.float32) * (2.0 / fan_in) ** 0.5
    # non-trivial BN affine params to exercise the scale/shift path
    gamma = 0.5 + jnp.arange(Cout, dtype=jnp.float32) / Cout
    beta = jnp.arange(Cout, dtype=jnp.float32) * 0.1 - 0.3

    out = basic_conv(x, w, gamma, beta, padding=1)
    out = jax.block_until_ready(out)

    ref = reference(x, w, gamma, beta, padding=1)
    assert out.shape == (N, Cout, H, W)
    assert jnp.allclose(out, ref, atol=1e-4, rtol=1e-4), "mismatch vs JAX reference"

    print("KERNEL_OK")
</pallas_src>

<mosaic_0001>
module attributes {stable_mosaic.version = 11 : i64} {
  func.func @_basic_conv_kernel(%arg0: i32, %arg1: memref<2x4x326xf32, #tpu.memory_space<vmem>>, %arg2: memref<8x72xf32, #tpu.memory_space<vmem>>, %arg3: memref<8x1xf32, #tpu.memory_space<vmem>>, %arg4: memref<8x1xf32, #tpu.memory_space<vmem>>, %arg5: memref<1x768xf32, #tpu.memory_space<vmem>>, %arg6: memref<8x768xf32, #tpu.memory_space<vmem>>, %arg7: memref<72x768xf32, #tpu.memory_space<vmem>>) attributes {dimension_semantics = [#tpu.dimension_semantics<arbitrary>], iteration_bounds = array<i64: 1>, scalar_prefetch = 0 : i64, scratch_operands = 1 : i64, tpu.core_type = #tpu.core_type<tc>, window_params = [{pipeline_mode = #tpu.pipeline_mode<synchronous>, transform_indices = @transform_0, window_bounds = array<i64: 2, 4, 326>}, {pipeline_mode = #tpu.pipeline_mode<synchronous>, transform_indices = @transform_1, window_bounds = array<i64: 8, 72>}, {pipeline_mode = #tpu.pipeline_mode<synchronous>, transform_indices = @transform_2, window_bounds = array<i64: 8, 1>}, {pipeline_mode = #tpu.pipeline_mode<synchronous>, transform_indices = @transform_3, window_bounds = array<i64: 8, 1>}, {pipeline_mode = #tpu.pipeline_mode<synchronous>, transform_indices = @transform_4, window_bounds = array<i64: 1, 768>}, {pipeline_mode = #tpu.pipeline_mode<synchronous>, transform_indices = @transform_5, window_bounds = array<i64: 8, 768>}]} {
    %cst = arith.constant 0.000000e+00 : f32
    %0 = vector.broadcast %cst : f32 to vector<72x768xf32>
    %c0 = arith.constant 0 : index
    %c0_0 = arith.constant 0 : index
    %1 = vector.load %arg7[%c0, %c0_0] : memref<72x768xf32, #tpu.memory_space<vmem>>, vector<72x768xf32>
    tpu.vector_store %arg7[%c0, %c0_0], %0 {strides = array<i32>} : memref<72x768xf32, #tpu.memory_space<vmem>>, vector<72x768xf32>,
    %c0_1 = arith.constant 0 : index
    %c0_2 = arith.constant 0 : index
    %c0_3 = arith.constant 0 : index
    %2 = vector.load %arg1[%c0_1, %c0_2, %c0_3] : memref<2x4x326xf32, #tpu.memory_space<vmem>>, vector<1x4x288xf32>
    %3 = vector.shape_cast %2 : vector<1x4x288xf32> to vector<4x288xf32>
    %c0_4 = arith.constant 0 : index
    %c0_5 = arith.constant 0 : index
    %4 = vector.load %arg7[%c0_4, %c0_5] : memref<72x768xf32, #tpu.memory_space<vmem>>, vector<4x288xf32>
    tpu.vector_store %arg7[%c0_4, %c0_5], %3 {strides = array<i32>} : memref<72x768xf32, #tpu.memory_space<vmem>>, vector<4x288xf32>,
    %c0_6 = arith.constant 0 : index
    %c0_7 = arith.constant 0 : index
    %c1 = arith.constant 1 : index
    %5 = vector.load %arg1[%c0_6, %c0_7, %c1] : memref<2x4x326xf32, #tpu.memory_space<vmem>>, vector<1x4x288xf32>
    %6 = vector.shape_cast %5 : vector<1x4x288xf32> to vector<4x288xf32>
    %c8 = arith.constant 8 : index
    %c0_8 = arith.constant 0 : index
    %7 = vector.load %arg7[%c8, %c0_8] : memref<72x768xf32, #tpu.memory_space<vmem>>, vector<4x288xf32>
    tpu.vector_store %arg7[%c8, %c0_8], %6 {strides = array<i32>} : memref<72x768xf32, #tpu.memory_space<vmem>>, vector<4x288xf32>,
    %c0_9 = arith.constant 0 : index
    %c0_10 = arith.constant 0 : index
    %c2 = arith.constant 2 : index
    %8 = vector.load %arg1[%c0_9, %c0_10, %c2] : memref<2x4x326xf32, #tpu.memory_space<vmem>>, vector<1x4x288xf32>
    %9 = vector.shape_cast %8 : vector<1x4x288xf32> to vector<4x288xf32>
    %c16 = arith.constant 16 : index
    %c0_11 = arith.constant 0 : index
    %10 = vector.load %arg7[%c16, %c0_11] : memref<72x768xf32, #tpu.memory_space<vmem>>, vector<4x288xf32>
    tpu.vector_store %arg7[%c16, %c0_11], %9 {strides = array<i32>} : memref<72x768xf32, #tpu.memory_space<vmem>>, vector<4x288xf32>,
    %c0_12 = arith.constant 0 : index
    %c0_13 = arith.constant 0 : index
    %c18 = arith.constant 18 : index
    %11 = vector.load %arg1[%c0_12, %c0_13, %c18] : memref<2x4x326xf32, #tpu.memory_space<vmem>>, vector<1x4x288xf32>
    %12 = vector.shape_cast %11 : vector<1x4x288xf32> to vector<4x288xf32>
    %c24 = arith.constant 24 : index
    %c0_14 = arith.constant 0 : index
    %13 = vector.load %arg7[%c24, %c0_14] : memref<72x768xf32, #tpu.memory_space<vmem>>, vector<4x288xf32>
    tpu.vector_store %arg7[%c24, %c0_14], %12 {strides = array<i32>} : memref<72x768xf32, #tpu.memory_space<vmem>>, vector<4x288xf32>,
    %c0_15 = arith.constant 0 : index
    %c0_16 = arith.constant 0 : index
    %c19 = arith.constant 19 : index
    %14 = vector.load %arg1[%c0_15, %c0_16, %c19] : memref<2x4x326xf32, #tpu.memory_space<vmem>>, vector<1x4x288xf32>
    %15 = vector.shape_cast %14 : vector<1x4x288xf32> to vector<4x288xf32>
    %c32 = arith.constant 32 : index
    %c0_17 = arith.constant 0 : index
    %16 = vector.load %arg7[%c32, %c0_17] : memref<72x768xf32, #tpu.memory_space<vmem>>, vector<4x288xf32>
    tpu.vector_store %arg7[%c32, %c0_17], %15 {strides = array<i32>} : memref<72x768xf32, #tpu.memory_space<vmem>>, vector<4x288xf32>,
    %c0_18 = arith.constant 0 : index
    %c0_19 = arith.constant 0 : index
    %c20 = arith.constant 20 : index
    %17 = vector.load %arg1[%c0_18, %c0_19, %c20] : memref<2x4x326xf32, #tpu.memory_space<vmem>>, vector<1x4x288xf32>
    %18 = vector.shape_cast %17 : vector<1x4x288xf32> to vector<4x288xf32>
    %c40 = arith.constant 40 : index
    %c0_20 = arith.constant 0 : index
    %19 = vector.load %arg7[%c40, %c0_20] : memref<72x768xf32, #tpu.memory_space<vmem>>, vector<4x288xf32>
    tpu.vector_store %arg7[%c40, %c0_20], %18 {strides = array<i32>} : memref<72x768xf32, #tpu.memory_space<vmem>>, vector<4x288xf32>,
    %c0_21 = arith.constant 0 : index
    %c0_22 = arith.constant 0 : index
    %c36 = arith.constant 36 : index
    %20 = vector.load %arg1[%c0_21, %c0_22, %c36] : memref<2x4x326xf32, #tpu.memory_space<vmem>>, vector<1x4x288xf32>
    %21 = vector.shape_cast %20 : vector<1x4x288xf32> to vector<4x288xf32>
    %c48 = arith.constant 48 : index
    %c0_23 = arith.constant 0 : index
    %22 = vector.load %arg7[%c48, %c0_23] : memref<72x768xf32, #tpu.memory_space<vmem>>, vector<4x288xf32>
    tpu.vector_store %arg7[%c48, %c0_23], %21 {strides = array<i32>} : memref<72x768xf32, #tpu.memory_space<vmem>>, vector<4x288xf32>,
    %c0_24 = arith.constant 0 : index
    %c0_25 = arith.constant 0 : index
    %c37 = arith.constant 37 : index
    %23 = vector.load %arg1[%c0_24, %c0_25, %c37] : memref<2x4x326xf32, #tpu.memory_space<vmem>>, vector<1x4x288xf32>
    %24 = vector.shape_cast %23 : vector<1x4x288xf32> to vector<4x288xf32>
    %c56 = arith.constant 56 : index
    %c0_26 = arith.constant 0 : index
    %25 = vector.load %arg7[%c56, %c0_26] : memref<72x768xf32, #tpu.memory_space<vmem>>, vector<4x288xf32>
    tpu.vector_store %arg7[%c56, %c0_26], %24 {strides = array<i32>} : memref<72x768xf32, #tpu.memory_space<vmem>>, vector<4x288xf32>,
    %c0_27 = arith.constant 0 : index
    %c0_28 = arith.constant 0 : index
    %c38 = arith.constant 38 : index
    %26 = vector.load %arg1[%c0_27, %c0_28, %c38] : memref<2x4x326xf32, #tpu.memory_space<vmem>>, vector<1x4x288xf32>
    %27 = vector.shape_cast %26 : vector<1x4x288xf32> to vector<4x288xf32>
    %c64 = arith.constant 64 : index
    %c0_29 = arith.constant 0 : index
    %28 = vector.load %arg7[%c64, %c0_29] : memref<72x768xf32, #tpu.memory_space<vmem>>, vector<4x288xf32>
    tpu.vector_store %arg7[%c64, %c0_29], %27 {strides = array<i32>} : memref<72x768xf32, #tpu.memory_space<vmem>>, vector<4x288xf32>,
    %c1_30 = arith.constant 1 : index
    %c0_31 = arith.constant 0 : index
    %c0_32 = arith.constant 0 : index
    %29 = vector.load %arg1[%c1_30, %c0_31, %c0_32] : memref<2x4x326xf32, #tpu.memory_space<vmem>>, vector<1x4x288xf32>
    %30 = vector.shape_cast %29 : vector<1x4x288xf32> to vector<4x288xf32>
    %c0_33 = arith.constant 0 : index
    %c384 = arith.constant 384 : index
    %31 = vector.load %arg7[%c0_33, %c384] : memref<72x768xf32, #tpu.memory_space<vmem>>, vector<4x288xf32>
    tpu.vector_store %arg7[%c0_33, %c384], %30 {strides = array<i32>} : memref<72x768xf32, #tpu.memory_space<vmem>>, vector<4x288xf32>,
    %c1_34 = arith.constant 1 : index
    %c0_35 = arith.constant 0 : index
    %c1_36 = arith.constant 1 : index
    %32 = vector.load %arg1[%c1_34, %c0_35, %c1_36] : memref<2x4x326xf32, #tpu.memory_space<vmem>>, vector<1x4x288xf32>
    %33 = vector.shape_cast %32 : vector<1x4x288xf32> to vector<4x288xf32>
    %c8_37 = arith.constant 8 : index
    %c384_38 = arith.constant 384 : index
    %34 = vector.load %arg7[%c8_37, %c384_38] : memref<72x768xf32, #tpu.memory_space<vmem>>, vector<4x288xf32>
    tpu.vector_store %arg7[%c8_37, %c384_38], %33 {strides = array<i32>} : memref<72x768xf32, #tpu.memory_space<vmem>>, vector<4x288xf32>,
    %c1_39 = arith.constant 1 : index
    %c0_40 = arith.constant 0 : index
    %c2_41 = arith.constant 2 : index
    %35 = vector.load %arg1[%c1_39, %c0_40, %c2_41] : memref<2x4x326xf32, #tpu.memory_space<vmem>>, vector<1x4x288xf32>
    %36 = vector.shape_cast %35 : vector<1x4x288xf32> to vector<4x288xf32>
    %c16_42 = arith.constant 16 : index
    %c384_43 = arith.constant 384 : index
    %37 = vector.load %arg7[%c16_42, %c384_43] : memref<72x768xf32, #tpu.memory_space<vmem>>, vector<4x288xf32>
    tpu.vector_store %arg7[%c16_42, %c384_43], %36 {strides = array<i32>} : memref<72x768xf32, #tpu.memory_space<vmem>>, vector<4x288xf32>,
    %c1_44 = arith.constant 1 : index
    %c0_45 = arith.constant 0 : index
    %c18_46 = arith.constant 18 : index
    %38 = vector.load %arg1[%c1_44, %c0_45, %c18_46] : memref<2x4x326xf32, #tpu.memory_space<vmem>>, vector<1x4x288xf32>
    %39 = vector.shape_cast %38 : vector<1x4x288xf32> to vector<4x288xf32>
    %c24_47 = arith.constant 24 : index
    %c384_48 = arith.constant 384 : index
    %40 = vector.load %arg7[%c24_47, %c384_48] : memref<72x768xf32, #tpu.memory_space<vmem>>, vector<4x288xf32>
    tpu.vector_store %arg7[%c24_47, %c384_48], %39 {strides = array<i32>} : memref<72x768xf32, #tpu.memory_space<vmem>>, vector<4x288xf32>,
    %c1_49 = arith.constant 1 : index
    %c0_50 = arith.constant 0 : index
    %c19_51 = arith.constant 19 : index
    %41 = vector.load %arg1[%c1_49, %c0_50, %c19_51] : memref<2x4x326xf32, #tpu.memory_space<vmem>>, vector<1x4x288xf32>
    %42 = vector.shape_cast %41 : vector<1x4x288xf32> to vector<4x288xf32>
    %c32_52 = arith.constant 32 : index
    %c384_53 = arith.constant 384 : index
    %43 = vector.load %arg7[%c32_52, %c384_53] : memref<72x768xf32, #tpu.memory_space<vmem>>, vector<4x288xf32>
    tpu.vector_store %arg7[%c32_52, %c384_53], %42 {strides = array<i32>} : memref<72x768xf32, #tpu.memory_space<vmem>>, vector<4x288xf32>,
    %c1_54 = arith.constant 1 : index
    %c0_55 = arith.constant 0 : index
    %c20_56 = arith.constant 20 : index
    %44 = vector.load %arg1[%c1_54, %c0_55, %c20_56] : memref<2x4x326xf32, #tpu.memory_space<vmem>>, vector<1x4x288xf32>
    %45 = vector.shape_cast %44 : vector<1x4x288xf32> to vector<4x288xf32>
    %c40_57 = arith.constant 40 : index
    %c384_58 = arith.constant 384 : index
    %46 = vector.load %arg7[%c40_57, %c384_58] : memref<72x768xf32, #tpu.memory_space<vmem>>, vector<4x288xf32>
    tpu.vector_store %arg7[%c40_57, %c384_58], %45 {strides = array<i32>} : memref<72x768xf32, #tpu.memory_space<vmem>>, vector<4x288xf32>,
    %c1_59 = arith.constant 1 : index
    %c0_60 = arith.constant 0 : index
    %c36_61 = arith.constant 36 : index
    %47 = vector.load %arg1[%c1_59, %c0_60, %c36_61] : memref<2x4x326xf32, #tpu.memory_space<vmem>>, vector<1x4x288xf32>
    %48 = vector.shape_cast %47 : vector<1x4x288xf32> to vector<4x288xf32>
    %c48_62 = arith.constant 48 : index
    %c384_63 = arith.constant 384 : index
    %49 = vector.load %arg7[%c48_62, %c384_63] : memref<72x768xf32, #tpu.memory_space<vmem>>, vector<4x288xf32>
    tpu.vector_store %arg7[%c48_62, %c384_63], %48 {strides = array<i32>} : memref<72x768xf32, #tpu.memory_space<vmem>>, vector<4x288xf32>,
    %c1_64 = arith.constant 1 : index
    %c0_65 = arith.constant 0 : index
    %c37_66 = arith.constant 37 : index
    %50 = vector.load %arg1[%c1_64, %c0_65, %c37_66] : memref<2x4x326xf32, #tpu.memory_space<vmem>>, vector<1x4x288xf32>
    %51 = vector.shape_cast %50 : vector<1x4x288xf32> to vector<4x288xf32>
    %c56_67 = arith.constant 56 : index
    %c384_68 = arith.constant 384 : index
    %52 = vector.load %arg7[%c56_67, %c384_68] : memref<72x768xf32, #tpu.memory_space<vmem>>, vector<4x288xf32>
    tpu.vector_store %arg7[%c56_67, %c384_68], %51 {strides = array<i32>} : memref<72x768xf32, #tpu.memory_space<vmem>>, vector<4x288xf32>,
    %c1_69 = arith.constant 1 : index
    %c0_70 = arith.constant 0 : index
    %c38_71 = arith.constant 38 : index
    %53 = vector.load %arg1[%c1_69, %c0_70, %c38_71] : memref<2x4x326xf32, #tpu.memory_space<vmem>>, vector<1x4x288xf32>
    %54 = vector.shape_cast %53 : vector<1x4x288xf32> to vector<4x288xf32>
    %c64_72 = arith.constant 64 : index
    %c384_73 = arith.constant 384 : index
    %55 = vector.load %arg7[%c64_72, %c384_73] : memref<72x768xf32, #tpu.memory_space<vmem>>, vector<4x288xf32>
    tpu.vector_store %arg7[%c64_72, %c384_73], %54 {strides = array<i32>} : memref<72x768xf32, #tpu.memory_space<vmem>>, vector<4x288xf32>,
    %c0_74 = arith.constant 0 : index
    %c0_75 = arith.constant 0 : index
    %56 = vector.load %arg2[%c0_74, %c0_75] : memref<8x72xf32, #tpu.memory_space<vmem>>, vector<8x72xf32>
    %c0_76 = arith.constant 0 : index
    %c0_77 = arith.constant 0 : index
    %57 = vector.load %arg7[%c0_76, %c0_77] : memref<72x768xf32, #tpu.memory_space<vmem>>, vector<72x768xf32>
    %cst_78 = arith.constant dense<0.000000e+00> : vector<8x768xf32>
    %58 = tpu.matmul %56, %57, %cst_78 {dimension_numbers = #tpu.dot_dimension_numbers<[1], [0], [0], [1], [0, 0, 1, 1], [], []>} : vector<8x72xf32>, vector<72x768xf32>, vector<8x768xf32> -> vector<8x768xf32>
    %c0_79 = arith.constant 0 : index
    %c0_80 = arith.constant 0 : index
    %59 = vector.load %arg5[%c0_79, %c0_80] : memref<1x768xf32, #tpu.memory_space<vmem>>, vector<1x768xf32>
    %60 = vector.broadcast %59 : vector<1x768xf32> to vector<8x768xf32>
    %61 = arith.mulf %58, %60 : vector<8x768xf32>
    %cst_81 = arith.constant dense<0.000000e+00> : vector<8xf32>
    %62 = vector.multi_reduction <add>, %61, %cst_81 [1] : vector<8x768xf32> to vector<8xf32>
    %63 = vector.shape_cast %62 : vector<8xf32> to vector<8x1xf32>
    %cst_82 = arith.constant 0.001953125 : f32
    %64 = vector.broadcast %cst_82 : f32 to vector<8x1xf32>
    %65 = arith.mulf %63, %64 : vector<8x1xf32>
    %66 = vector.broadcast %65 : vector<8x1xf32> to vector<8x768xf32>
    %67 = arith.subf %58, %66 : vector<8x768xf32>
    %68 = vector.broadcast %59 : vector<1x768xf32> to vector<8x768xf32>
    %69 = arith.mulf %67, %68 : vector<8x768xf32>
    %70 = arith.mulf %69, %69 : vector<8x768xf32>
    %cst_83 = arith.constant dense<0.000000e+00> : vector<8xf32>
    %71 = vector.multi_reduction <add>, %70, %cst_83 [1] : vector<8x768xf32> to vector<8xf32>
    %72 = vector.shape_cast %71 : vector<8xf32> to vector<8x1xf32>
    %cst_84 = arith.constant 0.001953125 : f32
    %73 = vector.broadcast %cst_84 : f32 to vector<8x1xf32>
    %74 = arith.mulf %72, %73 : vector<8x1xf32>
    %c0_85 = arith.constant 0 : index
    %c0_86 = arith.constant 0 : index
    %75 = vector.load %arg3[%c0_85, %c0_86] : memref<8x1xf32, #tpu.memory_space<vmem>>, vector<8x1xf32>
    %cst_87 = arith.constant 9.99999974E-6 : f32
    %76 = vector.broadcast %cst_87 : f32 to vector<8x1xf32>
    %77 = arith.addf %74, %76 : vector<8x1xf32>
    %78 = math.rsqrt %77 : vector<8x1xf32>
    %79 = arith.mulf %75, %78 : vector<8x1xf32>
    %c0_88 = arith.constant 0 : index
    %c0_89 = arith.constant 0 : index
    %80 = vector.load %arg4[%c0_88, %c0_89] : memref<8x1xf32, #tpu.memory_space<vmem>>, vector<8x1xf32>
    %81 = arith.mulf %65, %79 : vector<8x1xf32>
    %82 = arith.subf %80, %81 : vector<8x1xf32>
    %83 = vector.broadcast %79 : vector<8x1xf32> to vector<8x768xf32>
    %84 = arith.mulf %58, %83 : vector<8x768xf32>
    %85 = vector.broadcast %82 : vector<8x1xf32> to vector<8x768xf32>
    %86 = arith.addf %84, %85 : vector<8x768xf32>
    %cst_90 = arith.constant 0.000000e+00 : f32
    %87 = vector.broadcast %cst_90 : f32 to vector<8x768xf32>
    %88 = arith.maximumf %86, %87 : vector<8x768xf32>
    %c0_91 = arith.constant 0 : index
    %c0_92 = arith.constant 0 : index
    %89 = vector.load %arg6[%c0_91, %c0_92] : memref<8x768xf32, #tpu.memory_space<vmem>>, vector<8x768xf32>
    tpu.vector_store %arg6[%c0_91, %c0_92], %88 {strides = array<i32>} : memref<8x768xf32, #tpu.memory_space<vmem>>, vector<8x768xf32>,
    return
  }
  func.func @transform_0(%arg0: i32) -> (i32, i32, i32) {
    %c0_i32 = arith.constant 0 : i32
    %c0_i32_0 = arith.constant 0 : i32
    %c0_i32_1 = arith.constant 0 : i32
    %c0_i32_2 = arith.constant 0 : i32
    return %c0_i32, %c0_i32_0, %c0_i32_1 : i32, i32, i32
  }
  func.func @transform_1(%arg0: i32) -> (i32, i32) {
    %c0_i32 = arith.constant 0 : i32
    %c0_i32_0 = arith.constant 0 : i32
    %c0_i32_1 = arith.constant 0 : i32
    return %c0_i32, %c0_i32_0 : i32, i32
  }
  func.func @transform_2(%arg0: i32) -> (i32, i32) {
    %c0_i32 = arith.constant 0 : i32
    %c0_i32_0 = arith.constant 0 : i32
    %c0_i32_1 = arith.constant 0 : i32
    return %c0_i32, %c0_i32_0 : i32, i32
  }
  func.func @transform_3(%arg0: i32) -> (i32, i32) {
    %c0_i32 = arith.constant 0 : i32
    %c0_i32_0 = arith.constant 0 : i32
    %c0_i32_1 = arith.constant 0 : i32
    return %c0_i32, %c0_i32_0 : i32, i32
  }
  func.func @transform_4(%arg0: i32) -> (i32, i32) {
    %c0_i32 = arith.constant 0 : i32
    %c0_i32_0 = arith.constant 0 : i32
    %c0_i32_1 = arith.constant 0 : i32
    return %c0_i32, %c0_i32_0 : i32, i32
  }
  func.func @transform_5(%arg0: i32) -> (i32, i32) {
    %c0_i32 = arith.constant 0 : i32
    %c0_i32_0 = arith.constant 0 : i32
    %c0_i32_1 = arith.constant 0 : i32
    return %c0_i32, %c0_i32_0 : i32, i32
  }
}

</mosaic_0001>

<llo_original>
// kernel: tpu_custom_call.1
$region0: #{tpu_custom_call.1}
  #allocation0 [shape = 'u32[]', space=smem, size = 0x4, offset = 0x4, fixed_abs, tag = 'smem constant byte address 0x4 - core index']
  #allocation1 [shape = 'u32[144,128]{1,0:T(1,128)}', space=vmem, size = 0x12000, scoped, tag = 'internal scratch']
  #allocation2 [shape = 'f32[72,768]{1,0:T(8,128)}', space=vmem, size = 0x36000, scoped, tag = 'scratch operand']
  %s0 = inlined_call_operand.hbm [shape: f32[2,4,326], index: 0, kind: input, shape index: {}]
  %s1 = inlined_call_operand.vmem [shape: f32[8,72], index: 1, kind: input, shape index: {}]
  %s2 = inlined_call_operand.vmem [shape: f32[8,1], index: 2, kind: input, shape index: {}]
  %s3 = inlined_call_operand.vmem [shape: f32[8,1], index: 3, kind: input, shape index: {}]
  %s4 = inlined_call_operand.vmem [shape: f32[1,768], index: 4, kind: input, shape index: {}]
  %s5 = inlined_call_operand.hbm [shape: f32[8,768], index: 5, kind: output, shape index: {}]
  %s6 = sld [smem:[#allocation0]]
  $region34: #{tpu_custom_call.1} parent=0
    _
  %s8 = ssub.s32 1, %s6
  %s9 = scalar_select 0, %s8, %s6
  $region1: #{tpu_custom_call.1} parent=0
    #allocation3 [shape = 'u8[12288]{0}', space=vmem, size = 0x3000, scoped, tag = 'input window, operand 0, single buffered']
    #allocation4 [shape = 's32[1]{0}', space=sflag, size = 0x4, scoped, tag = 'scoped memory for tpu_custom_call.1']
    #allocation5 [shape = 's32[1]{0}', space=sflag, size = 0x4, scoped, tag = 'scoped memory for tpu_custom_call.1']
    #allocation6 [shape = 'u8[24576]{0}', space=vmem, size = 0x6000, scoped, tag = 'output window, operand 0, single buffered']
    %10 = vsyncpa [#allocation4], 0
    %11 = vsyncpa [#allocation5], 0
    // Predicated region
    $region2: #{tpu_custom_call.1} parent=1 // pred_check
      _
    $region3: #{tpu_custom_call.1} parent=1 // pred_check_branch
      %13 = sbr.rel (0) target = $region5
    $region4: #{tpu_custom_call.1} parent=1 // pred_region
      %s15 = ssub.s32 384, 384
      %16 = vsyncadd [#allocation4], %s15
      %s17 = sshll.u32 [#allocation3], 4
      %s18 = int_to_ptr.vmem [resolvable:$true] %s17
      %23 = dma.hbm_to_vmem [thread:$0]  %s0, 384, %s18, [#allocation4], 192, 192, 12
    $region5: #{tpu_custom_call.1} parent=1 // pred_fallthru
      _
    // Predicated region
    $region6: #{tpu_custom_call.1} parent=1 // pred_check
      _
    $region7: #{tpu_custom_call.1} parent=1 // pred_check_branch
      %25 = sbr.rel (0) target = $region9
    $region8: #{tpu_custom_call.1} parent=1 // pred_region
      _
    $region9: #{tpu_custom_call.1} parent=1 // pred_fallthru
      _
    // Predicated region
    $region10: #{tpu_custom_call.1} parent=1 // pred_check
      _
    $region11: #{tpu_custom_call.1} parent=1 // pred_check_branch
      %27 = sbr.rel (0) target = $region13
    $region12: #{tpu_custom_call.1} parent=1 // pred_region
      _
    $region13: #{tpu_custom_call.1} parent=1 // pred_fallthru
      _
    // Predicated region
    $region14: #{tpu_custom_call.1} parent=1 // pred_check
      _
    $region15: #{tpu_custom_call.1} parent=1 // pred_check_branch
      %29 = sbr.rel (0) target = $region17
    $region16: #{tpu_custom_call.1} parent=1 // pred_region
      _
    $region17: #{tpu_custom_call.1} parent=1 // pred_fallthru
      _
    // Predicated region
    $region18: #{tpu_custom_call.1} parent=1 // pred_check
      _
    $region19: #{tpu_custom_call.1} parent=1 // pred_check_branch
      %31 = sbr.rel (0) target = $region21
    $region20: #{tpu_custom_call.1} parent=1 // pred_region
      _
    $region21: #{tpu_custom_call.1} parent=1 // pred_fallthru
      _
    // Predicated region
    $region22: #{tpu_custom_call.1} parent=1 // pred_check
      _
    $region23: #{tpu_custom_call.1} parent=1 // pred_check_branch
      %33 = sbr.rel (0) target = $region25
    $region24: #{tpu_custom_call.1} parent=1 // pred_region
      %34 = dma.done [#allocation4], 384
    $region25: #{tpu_custom_call.1} parent=1 // pred_fallthru
      _
    %35 = vst [vmem:[#allocation2] sm:$0xff] 0.0
    %36 = vst [vmem:[#allocation2 + $0x8] sm:$0xff] 0.0
    %37 = vst [vmem:[#allocation2 + $0x10] sm:$0xff] 0.0
    %38 = vst [vmem:[#allocation2 + $0x18] sm:$0xff] 0.0
    %39 = vst [vmem:[#allocation2 + $0x20] sm:$0xff] 0.0
    %40 = vst [vmem:[#allocation2 + $0x28] sm:$0xff] 0.0
    %41 = vst [vmem:[#allocation2 + $0x30] sm:$0xff] 0.0
    %42 = vst [vmem:[#allocation2 + $0x38] sm:$0xff] 0.0
    %43 = vst [vmem:[#allocation2 + $0x40] sm:$0xff] 0.0
    %44 = vst [vmem:[#allocation2 + $0x48] sm:$0xff] 0.0
    %45 = vst [vmem:[#allocation2 + $0x50] sm:$0xff] 0.0
    %46 = vst [vmem:[#allocation2 + $0x58] sm:$0xff] 0.0
    %47 = vst [vmem:[#allocation2 + $0x60] sm:$0xff] 0.0
    %48 = vst [vmem:[#allocation2 + $0x68] sm:$0xff] 0.0
    %49 = vst [vmem:[#allocation2 + $0x70] sm:$0xff] 0.0
    %50 = vst [vmem:[#allocation2 + $0x78] sm:$0xff] 0.0
    %51 = vst [vmem:[#allocation2 + $0x80] sm:$0xff] 0.0
    %52 = vst [vmem:[#allocation2 + $0x88] sm:$0xff] 0.0
    %53 = vst [vmem:[#allocation2 + $0x90] sm:$0xff] 0.0
    %54 = vst [vmem:[#allocation2 + $0x98] sm:$0xff] 0.0
    %55 = vst [vmem:[#allocation2 + $0xa0] sm:$0xff] 0.0
    %56 = vst [vmem:[#allocation2 + $0xa8] sm:$0xff] 0.0
    %57 = vst [vmem:[#allocation2 + $0xb0] sm:$0xff] 0.0
    %58 = vst [vmem:[#allocation2 + $0xb8] sm:$0xff] 0.0
    %59 = vst [vmem:[#allocation2 + $0xc0] sm:$0xff] 0.0
    %60 = vst [vmem:[#allocation2 + $0xc8] sm:$0xff] 0.0
    %61 = vst [vmem:[#allocation2 + $0xd0] sm:$0xff] 0.0
    %62 = vst [vmem:[#allocation2 + $0xd8] sm:$0xff] 0.0
    %63 = vst [vmem:[#allocation2 + $0xe0] sm:$0xff] 0.0
    %64 = vst [vmem:[#allocation2 + $0xe8] sm:$0xff] 0.0
    %65 = vst [vmem:[#allocation2 + $0xf0] sm:$0xff] 0.0
    %66 = vst [vmem:[#allocation2 + $0xf8] sm:$0xff] 0.0
    %67 = vst [vmem:[#allocation2 + $0x100] sm:$0xff] 0.0
    %68 = vst [vmem:[#allocation2 + $0x108] sm:$0xff] 0.0
    %69 = vst [vmem:[#allocation2 + $0x110] sm:$0xff] 0.0
    %70 = vst [vmem:[#allocation2 + $0x118] sm:$0xff] 0.0
    %71 = vst [vmem:[#allocation2 + $0x120] sm:$0xff] 0.0
    %72 = vst [vmem:[#allocation2 + $0x128] sm:$0xff] 0.0
    %73 = vst [vmem:[#allocation2 + $0x130] sm:$0xff] 0.0
    %74 = vst [vmem:[#allocation2 + $0x138] sm:$0xff] 0.0
    %75 = vst [vmem:[#allocation2 + $0x140] sm:$0xff] 0.0
    %76 = vst [vmem:[#allocation2 + $0x148] sm:$0xff] 0.0
    %77 = vst [vmem:[#allocation2 + $0x150] sm:$0xff] 0.0
    %78 = vst [vmem:[#allocation2 + $0x158] sm:$0xff] 0.0
    %79 = vst [vmem:[#allocation2 + $0x160] sm:$0xff] 0.0
    %80 = vst [vmem:[#allocation2 + $0x168] sm:$0xff] 0.0
    %81 = vst [vmem:[#allocation2 + $0x170] sm:$0xff] 0.0
    %82 = vst [vmem:[#allocation2 + $0x178] sm:$0xff] 0.0
    %83 = vst [vmem:[#allocation2 + $0x180] sm:$0xff] 0.0
    %84 = vst [vmem:[#allocation2 + $0x188] sm:$0xff] 0.0
    %85 = vst [vmem:[#allocation2 + $0x190] sm:$0xff] 0.0
    %86 = vst [vmem:[#allocation2 + $0x198] sm:$0xff] 0.0
    %87 = vst [vmem:[#allocation2 + $0x1a0] sm:$0xff] 0.0
    %88 = vst [vmem:[#allocation2 + $0x1a8] sm:$0xff] 0.0
    %v89 = vld [vmem:[#allocation3] sm:$0xff]
    %v90 = vld [vmem:[#allocation3 + $0x8] sm:$0xf]
    %v92 = vcombine.high %v89, %v89
    %94 = vst [vmem:[#allocation2] sm:$0xf] %v89
    %95 = vst [vmem:[#allocation2 + $0x8] sm:$0xf] %v92
    %vm96 = vcmask 257024
    %97 = vst.msk [vmem:[#allocation2 + $0x10] sm:$0xf] %vm96, %v90
    %v98 = vld [vmem:[#allocation3] sm:$0xff]
    %v99 = vld [vmem:[#allocation3 + $0x8] sm:$0xf]
    %v102 = vcombine.high %v98, %v98
    %103 = vrot.lane.b32.xlu0 %v98, 127
    %v104 = vpop.permute.xlu0 %103
    %105 = vrot.lane.b32.xlu0 %v102, 127
    %v106 = vpop.permute.xlu0 %105
    %107 = vrot.lane.b32.xlu0 %v99, 127
    %v108 = vpop.permute.xlu0 %107
    %vm109 = vcmask 1039360
    %v110 = vsel %vm109, %v104, %v106
    %v111 = vsel %vm109, %v106, %v108
    %115 = vst [vmem:[#allocation2 + $0x30] sm:$0xf] %v110
    %116 = vst [vmem:[#allocation2 + $0x38] sm:$0xf] %v111
    %117 = vst.msk [vmem:[#allocation2 + $0x40] sm:$0xf] %vm96, %v108
    %v118 = vld [vmem:[#allocation3] sm:$0xff]
    %v119 = vld [vmem:[#allocation3 + $0x8] sm:$0xf]
    %v122 = vcombine.high %v118, %v118
    %123 = vrot.lane.b32.xlu0 %v118, 126
    %v124 = vpop.permute.xlu0 %123
    %125 = vrot.lane.b32.xlu0 %v122, 126
    %v126 = vpop.permute.xlu0 %125
    %127 = vrot.lane.b32.xlu0 %v119, 126
    %v128 = vpop.permute.xlu0 %127
    %vm129 = vcmask 1031168
    %v130 = vsel %vm129, %v124, %v126
    %v131 = vsel %vm129, %v126, %v128
    %135 = vst [vmem:[#allocation2 + $0x60] sm:$0xf] %v130
    %136 = vst [vmem:[#allocation2 + $0x68] sm:$0xf] %v131
    %137 = vst.msk [vmem:[#allocation2 + $0x70] sm:$0xf] %vm96, %v128
    %v138 = vld [vmem:[#allocation3] sm:$0xff]
    %v139 = vld [vmem:[#allocation3 + $0x8] sm:$0xf]
    %v142 = vcombine.high %v138, %v138
    %143 = vrot.lane.b32.xlu0 %v138, 110
    %v144 = vpop.permute.xlu0 %143
    %145 = vrot.lane.b32.xlu0 %v142, 110
    %v146 = vpop.permute.xlu0 %145
    %147 = vrot.lane.b32.xlu0 %v139, 110
    %v148 = vpop.permute.xlu0 %147
    %vm149 = vcmask 900096
    %v150 = vsel %vm149, %v144, %v146
    %v151 = vsel %vm149, %v146, %v148
    %155 = vst [vmem:[#allocation2 + $0x90] sm:$0xf] %v150
    %156 = vst [vmem:[#allocation2 + $0x98] sm:$0xf] %v151
    %157 = vst.msk [vmem:[#allocation2 + $0xa0] sm:$0xf] %vm96, %v148
    %v158 = vld [vmem:[#allocation3] sm:$0xff]
    %v159 = vld [vmem:[#allocation3 + $0x8] sm:$0xf]
    %v162 = vcombine.high %v158, %v158
    %163 = vrot.lane.b32.xlu0 %v158, 109
    %v164 = vpop.permute.xlu0 %163
    %165 = vrot.lane.b32.xlu0 %v162, 109
    %v166 = vpop.permute.xlu0 %165
    %167 = vrot.lane.b32.xlu0 %v159, 109
    %v168 = vpop.permute.xlu0 %167
    %vm169 = vcmask 891904
    %v170 = vsel %vm169, %v164, %v166
    %v171 = vsel %vm169, %v166, %v168
    %175 = vst [vmem:[#allocation2 + $0xc0] sm:$0xf] %v170
    %176 = vst [vmem:[#allocation2 + $0xc8] sm:$0xf] %v171
    %177 = vst.msk [vmem:[#allocation2 + $0xd0] sm:$0xf] %vm96, %v168
    %v178 = vld [vmem:[#allocation3] sm:$0xff]
    %v179 = vld [vmem:[#allocation3 + $0x8] sm:$0xf]
    %v182 = vcombine.high %v178, %v178
    %183 = vrot.lane.b32.xlu0 %v178, 108
    %v184 = vpop.permute.xlu0 %183
    %185 = vrot.lane.b32.xlu0 %v182, 108
    %v186 = vpop.permute.xlu0 %185
    %187 = vrot.lane.b32.xlu0 %v179, 108
    %v188 = vpop.permute.xlu0 %187
    %vm189 = vcmask 883712
    %v190 = vsel %vm189, %v184, %v186
    %v191 = vsel %vm189, %v186, %v188
    %195 = vst [vmem:[#allocation2 + $0xf0] sm:$0xf] %v190
    %196 = vst [vmem:[#allocation2 + $0xf8] sm:$0xf] %v191
    %197 = vst.msk [vmem:[#allocation2 + $0x100] sm:$0xf] %vm96, %v188
    %v198 = vld [vmem:[#allocation3] sm:$0xff]
    %v199 = vld [vmem:[#allocation3 + $0x8] sm:$0xf]
    %v202 = vcombine.high %v198, %v198
    %203 = vrot.lane.b32.xlu0 %v198, 92
    %v204 = vpop.permute.xlu0 %203
    %205 = vrot.lane.b32.xlu0 %v202, 92
    %v206 = vpop.permute.xlu0 %205
    %207 = vrot.lane.b32.xlu0 %v199, 92
    %v208 = vpop.permute.xlu0 %207
    %vm209 = vcmask 752640
    %v210 = vsel %vm209, %v204, %v206
    %v211 = vsel %vm209, %v206, %v208
    %215 = vst [vmem:[#allocation2 + $0x120] sm:$0xf] %v210
    %216 = vst [vmem:[#allocation2 + $0x128] sm:$0xf] %v211
    %217 = vst.msk [vmem:[#allocation2 + $0x130] sm:$0xf] %vm96, %v208
    %v218 = vld [vmem:[#allocation3] sm:$0xff]
    %v219 = vld [vmem:[#allocation3 + $0x8] sm:$0xf]
    %v222 = vcombine.high %v218, %v218
    %223 = vrot.lane.b32.xlu0 %v218, 91
    %v224 = vpop.permute.xlu0 %223
    %225 = vrot.lane.b32.xlu0 %v222, 91
    %v226 = vpop.permute.xlu0 %225
    %227 = vrot.lane.b32.xlu0 %v219, 91
    %v228 = vpop.permute.xlu0 %227
    %vm229 = vcmask 744448
    %v230 = vsel %vm229, %v224, %v226
    %v231 = vsel %vm229, %v226, %v228
    %235 = vst [vmem:[#allocation2 + $0x150] sm:$0xf] %v230
    %236 = vst [vmem:[#allocation2 + $0x158] sm:$0xf] %v231
    %237 = vst.msk [vmem:[#allocation2 + $0x160] sm:$0xf] %vm96, %v228
    %v238 = vld [vmem:[#allocation3] sm:$0xff]
    %v239 = vld [vmem:[#allocation3 + $0x8] sm:$0xf]
    %v242 = vcombine.high %v238, %v238
    %243 = vrot.lane.b32.xlu0 %v238, 90
    %v244 = vpop.permute.xlu0 %243
    %245 = vrot.lane.b32.xlu0 %v242, 90
    %v246 = vpop.permute.xlu0 %245
    %247 = vrot.lane.b32.xlu0 %v239, 90
    %v248 = vpop.permute.xlu0 %247
    %vm249 = vcmask 736256
    %v250 = vsel %vm249, %v244, %v246
    %v251 = vsel %vm249, %v246, %v248
    %255 = vst [vmem:[#allocation2 + $0x180] sm:$0xf] %v250
    %256 = vst [vmem:[#allocation2 + $0x188] sm:$0xf] %v251
    %257 = vst.msk [vmem:[#allocation2 + $0x190] sm:$0xf] %vm96, %v248
    %s258 = scalar_lea.vmem [#allocation3], 12
    %v259 = vld [vmem:[%s258] sm:$0xff]
    %v260 = vld [vmem:[%s258 + $0x8] sm:$0xf]
    %v262 = vcombine.high %v259, %v259
    %264 = vst [vmem:[#allocation2 + $0x18] sm:$0xf] %v259
    %265 = vst [vmem:[#allocation2 + $0x20] sm:$0xf] %v262
    %266 = vst.msk [vmem:[#allocation2 + $0x28] sm:$0xf] %vm96, %v260
    %v267 = vld [vmem:[%s258] sm:$0xff]
    %v268 = vld [vmem:[%s258 + $0x8] sm:$0xf]
    %v271 = vcombine.high %v267, %v267
    %272 = vrot.lane.b32.xlu0 %v267, 127
    %v273 = vpop.permute.xlu0 %272
    %274 = vrot.lane.b32.xlu0 %v271, 127
    %v275 = vpop.permute.xlu0 %274
    %276 = vrot.lane.b32.xlu0 %v268, 127
    %v277 = vpop.permute.xlu0 %276
    %v278 = vsel %vm109, %v273, %v275
    %v279 = vsel %vm109, %v275, %v277
    %283 = vst [vmem:[#allocation2 + $0x48] sm:$0xf] %v278
    %284 = vst [vmem:[#allocation2 + $0x50] sm:$0xf] %v279
    %285 = vst.msk [vmem:[#allocation2 + $0x58] sm:$0xf] %vm96, %v277
    %v286 = vld [vmem:[%s258] sm:$0xff]
    %v287 = vld [vmem:[%s258 + $0x8] sm:$0xf]
    %v290 = vcombine.high %v286, %v286
    %291 = vrot.lane.b32.xlu0 %v286, 126
    %v292 = vpop.permute.xlu0 %291
    %293 = vrot.lane.b32.xlu0 %v290, 126
    %v294 = vpop.permute.xlu0 %293
    %295 = vrot.lane.b32.xlu0 %v287, 126
    %v296 = vpop.permute.xlu0 %295
    %v297 = vsel %vm129, %v292, %v294
    %v298 = vsel %vm129, %v294, %v296
    %302 = vst [vmem:[#allocation2 + $0x78] sm:$0xf] %v297
    %303 = vst [vmem:[#allocation2 + $0x80] sm:$0xf] %v298
    %304 = vst.msk [vmem:[#allocation2 + $0x88] sm:$0xf] %vm96, %v296
    %v305 = vld [vmem:[%s258] sm:$0xff]
    %v306 = vld [vmem:[%s258 + $0x8] sm:$0xf]
    %v309 = vcombine.high %v305, %v305
    %310 = vrot.lane.b32.xlu0 %v305, 110
    %v311 = vpop.permute.xlu0 %310
    %312 = vrot.lane.b32.xlu0 %v309, 110
    %v313 = vpop.permute.xlu0 %312
    %314 = vrot.lane.b32.xlu0 %v306, 110
    %v315 = vpop.permute.xlu0 %314
    %v316 = vsel %vm149, %v311, %v313
    %v317 = vsel %vm149, %v313, %v315
    %321 = vst [vmem:[#allocation2 + $0xa8] sm:$0xf] %v316
    %322 = vst [vmem:[#allocation2 + $0xb0] sm:$0xf] %v317
    %323 = vst.msk [vmem:[#allocation2 + $0xb8] sm:$0xf] %vm96, %v315
    %v324 = vld [vmem:[%s258] sm:$0xff]
    %v325 = vld [vmem:[%s258 + $0x8] sm:$0xf]
    %v328 = vcombine.high %v324, %v324
    %329 = vrot.lane.b32.xlu0 %v324, 109
    %v330 = vpop.permute.xlu0 %329
    %331 = vrot.lane.b32.xlu0 %v328, 109
    %v332 = vpop.permute.xlu0 %331
    %333 = vrot.lane.b32.xlu0 %v325, 109
    %v334 = vpop.permute.xlu0 %333
    %v335 = vsel %vm169, %v330, %v332
    %v336 = vsel %vm169, %v332, %v334
    %340 = vst [vmem:[#allocation2 + $0xd8] sm:$0xf] %v335
    %341 = vst [vmem:[#allocation2 + $0xe0] sm:$0xf] %v336
    %342 = vst.msk [vmem:[#allocation2 + $0xe8] sm:$0xf] %vm96, %v334
    %v343 = vld [vmem:[%s258] sm:$0xff]
    %v344 = vld [vmem:[%s258 + $0x8] sm:$0xf]
    %v347 = vcombine.high %v343, %v343
    %348 = vrot.lane.b32.xlu0 %v343, 108
    %v349 = vpop.permute.xlu0 %348
    %350 = vrot.lane.b32.xlu0 %v347, 108
    %v351 = vpop.permute.xlu0 %350
    %352 = vrot.lane.b32.xlu0 %v344, 108
    %v353 = vpop.permute.xlu0 %352
    %v354 = vsel %vm189, %v349, %v351
    %v355 = vsel %vm189, %v351, %v353
    %359 = vst [vmem:[#allocation2 + $0x108] sm:$0xf] %v354
    %360 = vst [vmem:[#allocation2 + $0x110] sm:$0xf] %v355
    %361 = vst.msk [vmem:[#allocation2 + $0x118] sm:$0xf] %vm96, %v353
    %v362 = vld [vmem:[%s258] sm:$0xff]
    %v363 = vld [vmem:[%s258 + $0x8] sm:$0xf]
    %v366 = vcombine.high %v362, %v362
    %367 = vrot.lane.b32.xlu0 %v362, 92
    %v368 = vpop.permute.xlu0 %367
    %369 = vrot.lane.b32.xlu0 %v366, 92
    %v370 = vpop.permute.xlu0 %369
    %371 = vrot.lane.b32.xlu0 %v363, 92
    %v372 = vpop.permute.xlu0 %371
    %v373 = vsel %vm209, %v368, %v370
    %v374 = vsel %vm209, %v370, %v372
    %378 = vst [vmem:[#allocation2 + $0x138] sm:$0xf] %v373
    %379 = vst [vmem:[#allocation2 + $0x140] sm:$0xf] %v374
    %380 = vst.msk [vmem:[#allocation2 + $0x148] sm:$0xf] %vm96, %v372
    %v381 = vld [vmem:[%s258] sm:$0xff]
    %v382 = vld [vmem:[%s258 + $0x8] sm:$0xf]
    %v385 = vcombine.high %v381, %v381
    %386 = vrot.lane.b32.xlu0 %v381, 91
    %v387 = vpop.permute.xlu0 %386
    %388 = vrot.lane.b32.xlu0 %v385, 91
    %v389 = vpop.permute.xlu0 %388
    %390 = vrot.lane.b32.xlu0 %v382, 91
    %v391 = vpop.permute.xlu0 %390
    %v392 = vsel %vm229, %v387, %v389
    %v393 = vsel %vm229, %v389, %v391
    %397 = vst [vmem:[#allocation2 + $0x168] sm:$0xf] %v392
    %398 = vst [vmem:[#allocation2 + $0x170] sm:$0xf] %v393
    %399 = vst.msk [vmem:[#allocation2 + $0x178] sm:$0xf] %vm96, %v391
    %v400 = vld [vmem:[%s258] sm:$0xff]
    %v401 = vld [vmem:[%s258 + $0x8] sm:$0xf]
    %v404 = vcombine.high %v400, %v400
    %405 = vrot.lane.b32.xlu0 %v400, 90
    %v406 = vpop.permute.xlu0 %405
    %407 = vrot.lane.b32.xlu0 %v404, 90
    %v408 = vpop.permute.xlu0 %407
    %409 = vrot.lane.b32.xlu0 %v401, 90
    %v410 = vpop.permute.xlu0 %409
    %v411 = vsel %vm249, %v406, %v408
    %v412 = vsel %vm249, %v408, %v410
    %416 = vst [vmem:[#allocation2 + $0x198] sm:$0xf] %v411
    %417 = vst [vmem:[#allocation2 + $0x1a0] sm:$0xf] %v412
    %418 = vst.msk [vmem:[#allocation2 + $0x1a8] sm:$0xf] %vm96, %v410
    %v419 = vld [vmem:[%s1] sm:$0xff]
    %v420 = vld [vmem:[#allocation2] sm:$0xff]
    %v421 = vld [vmem:[#allocation2 + $0x8] sm:$0xff]
    %v422 = vld [vmem:[#allocation2 + $0x10] sm:$0xff]
    %v423 = vld [vmem:[#allocation2 + $0x18] sm:$0xff]
    %v424 = vld [vmem:[#allocation2 + $0x20] sm:$0xff]
    %v425 = vld [vmem:[#allocation2 + $0x28] sm:$0xff]
    %v426 = vld [vmem:[#allocation2 + $0x30] sm:$0xff]
    %v427 = vld [vmem:[#allocation2 + $0x38] sm:$0xff]
    %v428 = vld [vmem:[#allocation2 + $0x40] sm:$0xff]
    %v429 = vld [vmem:[#allocation2 + $0x48] sm:$0xff]
    %v430 = vld [vmem:[#allocation2 + $0x50] sm:$0xff]
    %v431 = vld [vmem:[#allocation2 + $0x58] sm:$0xff]
    %v432 = vld [vmem:[#allocation2 + $0x60] sm:$0xff]
    %v433 = vld [vmem:[#allocation2 + $0x68] sm:$0xff]
    %v434 = vld [vmem:[#allocation2 + $0x70] sm:$0xff]
    %v435 = vld [vmem:[#allocation2 + $0x78] sm:$0xff]
    %v436 = vld [vmem:[#allocation2 + $0x80] sm:$0xff]
    %v437 = vld [vmem:[#allocation2 + $0x88] sm:$0xff]
    %v438 = vld [vmem:[#allocation2 + $0x90] sm:$0xff]
    %v439 = vld [vmem:[#allocation2 + $0x98] sm:$0xff]
    %v440 = vld [vmem:[#allocation2 + $0xa0] sm:$0xff]
    %v441 = vld [vmem:[#allocation2 + $0xa8] sm:$0xff]
    %v442 = vld [vmem:[#allocation2 + $0xb0] sm:$0xff]
    %v443 = vld [vmem:[#allocation2 + $0xb8] sm:$0xff]
    %v444 = vld [vmem:[#allocation2 + $0xc0] sm:$0xff]
    %v445 = vld [vmem:[#allocation2 + $0xc8] sm:$0xff]
    %v446 = vld [vmem:[#allocation2 + $0xd0] sm:$0xff]
    %v447 = vld [vmem:[#allocation2 + $0xd8] sm:$0xff]
    %v448 = vld [vmem:[#allocation2 + $0xe0] sm:$0xff]
    %v449 = vld [vmem:[#allocation2 + $0xe8] sm:$0xff]
    %v450 = vld [vmem:[#allocation2 + $0xf0] sm:$0xff]
    %v451 = vld [vmem:[#allocation2 + $0xf8] sm:$0xff]
    %v452 = vld [vmem:[#allocation2 + $0x100] sm:$0xff]
    %v453 = vld [vmem:[#allocation2 + $0x108] sm:$0xff]
    %v454 = vld [vmem:[#allocation2 + $0x110] sm:$0xff]
    %v455 = vld [vmem:[#allocation2 + $0x118] sm:$0xff]
    %v456 = vld [vmem:[#allocation2 + $0x120] sm:$0xff]
    %v457 = vld [vmem:[#allocation2 + $0x128] sm:$0xff]
    %v458 = vld [vmem:[#allocation2 + $0x130] sm:$0xff]
    %v459 = vld [vmem:[#allocation2 + $0x138] sm:$0xff]
    %v460 = vld [vmem:[#allocation2 + $0x140] sm:$0xff]
    %v461 = vld [vmem:[#allocation2 + $0x148] sm:$0xff]
    %v462 = vld [vmem:[#allocation2 + $0x150] sm:$0xff]
    %v463 = vld [vmem:[#allocation2 + $0x158] sm:$0xff]
    %v464 = vld [vmem:[#allocation2 + $0x160] sm:$0xff]
    %v465 = vld [vmem:[#allocation2 + $0x168] sm:$0xff]
    %v466 = vld [vmem:[#allocation2 + $0x170] sm:$0xff]
    %v467 = vld [vmem:[#allocation2 + $0x178] sm:$0xff]
    %v468 = vld [vmem:[#allocation2 + $0x180] sm:$0xff]
    %v469 = vld [vmem:[#allocation2 + $0x188] sm:$0xff]
    %v470 = vld [vmem:[#allocation2 + $0x190] sm:$0xff]
    %v471 = vld [vmem:[#allocation2 + $0x198] sm:$0xff]
    %v472 = vld [vmem:[#allocation2 + $0x1a0] sm:$0xff]
    %v473 = vld [vmem:[#allocation2 + $0x1a8] sm:$0xff]
    %vm474 = vcmask 588800
    %v476 = vsel %vm474, %v419, 0
    %478 = vmatprep.subr.mxu0 %v421
    %479 = vmatpush1.msra.mxu0 %v420
    %480 = vmatprep.subr.mxu0 %v427
    %481 = vmatpush1.msra.mxu0 %v426
    %482 = vmatprep.subr.mxu0 %v433
    %483 = vmatpush1.msra.mxu0 %v432
    %484 = vmatprep.subr.mxu0 %v439
    %485 = vmatpush1.msra.mxu0 %v438
    %486 = vmatprep.subr.mxu0 %v445
    %487 = vmatpush1.msra.mxu0 %v444
    %488 = vmatprep.subr.mxu0 %v451
    %489 = vmatpush1.msra.mxu0 %v450
    %490 = vmatprep.subr.mxu0 %v457
    %491 = vmatpush1.msra.mxu0 %v456
    %492 = vmatprep.subr.mxu0 %v463
    %493 = vmatpush1.msra.mxu0 %v462
    %494 = vmatprep.subr.mxu0 %v469
    %495 = vmatpush1.msra.mxu0 %v468
    %496 = vmatprep.subr.mxu0 0.0
    %497 = vmatpush1.msra.mxu0 0.0
    %498 = vmatprep.subr.mxu0 0.0
    %499 = vmatpush1.msra.mxu0 0.0
    %500 = vmatprep.subr.mxu0 0.0
    %501 = vmatpush1.msra.mxu0 0.0
    %502 = vmatprep.subr.mxu0 0.0
    %503 = vmatpush1.msra.mxu0 0.0
    %504 = vmatprep.subr.mxu0 0.0
    %505 = vmatpush1.msra.mxu0 0.0
    %506 = vmatprep.subr.mxu0 0.0
    %507 = vmatpush1.msra.mxu0 0.0
    %508 = vmatprep.subr.mxu0 0.0
    %509 = vmatpush1.msra.mxu0 0.0
    %510 = vmatprep.subr.mxu0 0.0
    %511 = vmatpush1.msra.mxu0 0.0
    %512 = vmatprep.subr.mxu0 0.0
    %513 = vmatpush1.msra.mxu0 0.0
    %514 = vmatprep.subr.mxu0 0.0
    %515 = vmatpush1.msra.mxu0 0.0
    %516 = vmatprep.subr.mxu0 0.0
    %517 = vmatpush1.msra.mxu0 0.0
    %518 = vmatprep.subr.mxu0 0.0
    %519 = vmatpush1.msra.mxu0 0.0
    %520 = vmatprep.subr.mxu0 0.0
    %521 = vmatpush1.msra.mxu0 0.0
    %522 = vmatprep.subr.mxu0 0.0
    %523 = vmatpush1.msra.mxu0 0.0
    %524 = vmatprep.subr.mxu0 0.0
    %525 = vmatpush1.msra.mxu0 0.0
    %526 = vmatprep.subr.mxu0 0.0
    %527 = vmatpush1.msra.mxu0 0.0
    %528 = vmatprep.subr.mxu0 0.0
    %529 = vmatpush1.msra.mxu0 0.0
    %530 = vmatprep.subr.mxu0 0.0
    %531 = vmatpush1.msra.mxu0 0.0
    %532 = vmatprep.subr.mxu0 0.0
    %533 = vmatpush1.msra.mxu0 0.0
    %534 = vmatprep.subr.mxu0 0.0
    %535 = vmatpush1.msra.mxu0 0.0
    %536 = vmatprep.subr.mxu0 0.0
    %537 = vmatpush1.msra.mxu0 0.0
    %538 = vmatprep.subr.mxu0 0.0
    %539 = vmatpush1.msra.mxu0 0.0
    %540 = vmatprep.subr.mxu0 0.0
    %541 = vmatpush1.msra.mxu0 0.0
    %542 = vmatprep.mubr.f32.mxu0 0.0
    %543 = vmatmul.mubr.f32.gmra.mrb[0].mxu0 %v476
    %v544 = vpop.f32.mrb[0].mxu0
    %v545 = vadd.f32 0.0, %v544
    %v546 = vpop.f32.mrb[0].mxu0
    %v547 = vadd.f32 0.0, %v546
    %548 = vdwg.mxu0
    %549 = vmatprep.subr.mxu0 %v423
    %550 = vmatpush1.msra.mxu0 %v422
    %551 = vmatprep.subr.mxu0 %v429
    %552 = vmatpush1.msra.mxu0 %v428
    %553 = vmatprep.subr.mxu0 %v435
    %554 = vmatpush1.msra.mxu0 %v434
    %555 = vmatprep.subr.mxu0 %v441
    %556 = vmatpush1.msra.mxu0 %v440
    %557 = vmatprep.subr.mxu0 %v447
    %558 = vmatpush1.msra.mxu0 %v446
    %559 = vmatprep.subr.mxu0 %v453
    %560 = vmatpush1.msra.mxu0 %v452
    %561 = vmatprep.subr.mxu0 %v459
    %562 = vmatpush1.msra.mxu0 %v458
    %563 = vmatprep.subr.mxu0 %v465
    %564 = vmatpush1.msra.mxu0 %v464
    %565 = vmatprep.subr.mxu0 %v471
    %566 = vmatpush1.msra.mxu0 %v470
    %567 = vmatprep.subr.mxu0 0.0
    %568 = vmatpush1.msra.mxu0 0.0
    %569 = vmatprep.subr.mxu0 0.0
    %570 = vmatpush1.msra.mxu0 0.0
    %571 = vmatprep.subr.mxu0 0.0
    %572 = vmatpush1.msra.mxu0 0.0
    %573 = vmatprep.subr.mxu0 0.0
    %574 = vmatpush1.msra.mxu0 0.0
    %575 = vmatprep.subr.mxu0 0.0
    %576 = vmatpush1.msra.mxu0 0.0
    %577 = vmatprep.subr.mxu0 0.0
    %578 = vmatpush1.msra.mxu0 0.0
    %579 = vmatprep.subr.mxu0 0.0
    %580 = vmatpush1.msra.mxu0 0.0
    %581 = vmatprep.subr.mxu0 0.0
    %582 = vmatpush1.msra.mxu0 0.0
    %583 = vmatprep.subr.mxu0 0.0
    %584 = vmatpush1.msra.mxu0 0.0
    %585 = vmatprep.subr.mxu0 0.0
    %586 = vmatpush1.msra.mxu0 0.0
    %587 = vmatprep.subr.mxu0 0.0
    %588 = vmatpush1.msra.mxu0 0.0
    %589 = vmatprep.subr.mxu0 0.0
    %590 = vmatpush1.msra.mxu0 0.0
    %591 = vmatprep.subr.mxu0 0.0
    %592 = vmatpush1.msra.mxu0 0.0
    %593 = vmatprep.subr.mxu0 0.0
    %594 = vmatpush1.msra.mxu0 0.0
    %595 = vmatprep.subr.mxu0 0.0
    %596 = vmatpush1.msra.mxu0 0.0
    %597 = vmatprep.subr.mxu0 0.0
    %598 = vmatpush1.msra.mxu0 0.0
    %599 = vmatprep.subr.mxu0 0.0
    %600 = vmatpush1.msra.mxu0 0.0
    %601 = vmatprep.subr.mxu0 0.0
    %602 = vmatpush1.msra.mxu0 0.0
    %603 = vmatprep.subr.mxu0 0.0
    %604 = vmatpush1.msra.mxu0 0.0
    %605 = vmatprep.subr.mxu0 0.0
    %606 = vmatpush1.msra.mxu0 0.0
    %607 = vmatprep.subr.mxu0 0.0
    %608 = vmatpush1.msra.mxu0 0.0
    %609 = vmatprep.subr.mxu0 0.0
    %610 = vmatpush1.msra.mxu0 0.0
    %611 = vmatprep.subr.mxu0 0.0
    %612 = vmatpush1.msra.mxu0 0.0
    %613 = vmatprep.mubr.f32.mxu0 0.0
    %614 = vmatmul.mubr.f32.gmra.mrb[0].mxu0 %v476
    %v615 = vpop.f32.mrb[0].mxu0
    %v616 = vadd.f32 0.0, %v615
    %v617 = vpop.f32.mrb[0].mxu0
    %v618 = vadd.f32 0.0, %v617
    %619 = vdwg.mxu0
    %620 = vmatprep.subr.mxu0 %v425
    %621 = vmatpush1.msra.mxu0 %v424
    %622 = vmatprep.subr.mxu0 %v431
    %623 = vmatpush1.msra.mxu0 %v430
    %624 = vmatprep.subr.mxu0 %v437
    %625 = vmatpush1.msra.mxu0 %v436
    %626 = vmatprep.subr.mxu0 %v443
    %627 = vmatpush1.msra.mxu0 %v442
    %628 = vmatprep.subr.mxu0 %v449
    %629 = vmatpush1.msra.mxu0 %v448
    %630 = vmatprep.subr.mxu0 %v455
    %631 = vmatpush1.msra.mxu0 %v454
    %632 = vmatprep.subr.mxu0 %v461
    %633 = vmatpush1.msra.mxu0 %v460
    %634 = vmatprep.subr.mxu0 %v467
    %635 = vmatpush1.msra.mxu0 %v466
    %636 = vmatprep.subr.mxu0 %v473
    %637 = vmatpush1.msra.mxu0 %v472
    %638 = vmatprep.subr.mxu0 0.0
    %639 = vmatpush1.msra.mxu0 0.0
    %640 = vmatprep.subr.mxu0 0.0
    %641 = vmatpush1.msra.mxu0 0.0
    %642 = vmatprep.subr.mxu0 0.0
    %643 = vmatpush1.msra.mxu0 0.0
    %644 = vmatprep.subr.mxu0 0.0
    %645 = vmatpush1.msra.mxu0 0.0
    %646 = vmatprep.subr.mxu0 0.0
    %647 = vmatpush1.msra.mxu0 0.0
    %648 = vmatprep.subr.mxu0 0.0
    %649 = vmatpush1.msra.mxu0 0.0
    %650 = vmatprep.subr.mxu0 0.0
    %651 = vmatpush1.msra.mxu0 0.0
    %652 = vmatprep.subr.mxu0 0.0
    %653 = vmatpush1.msra.mxu0 0.0
    %654 = vmatprep.subr.mxu0 0.0
    %655 = vmatpush1.msra.mxu0 0.0
    %656 = vmatprep.subr.mxu0 0.0
    %657 = vmatpush1.msra.mxu0 0.0
    %658 = vmatprep.subr.mxu0 0.0
    %659 = vmatpush1.msra.mxu0 0.0
    %660 = vmatprep.subr.mxu0 0.0
    %661 = vmatpush1.msra.mxu0 0.0
    %662 = vmatprep.subr.mxu0 0.0
    %663 = vmatpush1.msra.mxu0 0.0
    %664 = vmatprep.subr.mxu0 0.0
    %665 = vmatpush1.msra.mxu0 0.0
    %666 = vmatprep.subr.mxu0 0.0
    %667 = vmatpush1.msra.mxu0 0.0
    %668 = vmatprep.subr.mxu0 0.0
    %669 = vmatpush1.msra.mxu0 0.0
    %670 = vmatprep.subr.mxu0 0.0
    %671 = vmatpush1.msra.mxu0 0.0
    %672 = vmatprep.subr.mxu0 0.0
    %673 = vmatpush1.msra.mxu0 0.0
    %674 = vmatprep.subr.mxu0 0.0
    %675 = vmatpush1.msra.mxu0 0.0
    %676 = vmatprep.subr.mxu0 0.0
    %677 = vmatpush1.msra.mxu0 0.0
    %678 = vmatprep.subr.mxu0 0.0
    %679 = vmatpush1.msra.mxu0 0.0
    %680 = vmatprep.subr.mxu0 0.0
    %681 = vmatpush1.msra.mxu0 0.0
    %682 = vmatprep.subr.mxu0 0.0
    %683 = vmatpush1.msra.mxu0 0.0
    %684 = vmatprep.mubr.f32.mxu0 0.0
    %685 = vmatmul.mubr.f32.gmra.mrb[0].mxu0 %v476
    %v686 = vpop.f32.mrb[0].mxu0
    %v687 = vadd.f32 0.0, %v686
    %v688 = vpop.f32.mrb[0].mxu0
    %v689 = vadd.f32 0.0, %v688
    %690 = vdwg.mxu0
    %v691 = vld [vmem:[%s4] sm:$0x3f]
    %v693 = vlaneseq
    %v694 = vshrl.u32 %v693, 7
    %v695 = vsub.s32 0, %v694
    %v696 = vrot.slane %v691, %v695
    %v697 = vlaneseq
    %v698 = vshrl.u32 %v697, 7
    %v699 = vsub.s32 1, %v698
    %v700 = vrot.slane %v691, %v699
    %v701 = vlaneseq
    %v702 = vshrl.u32 %v701, 7
    %v703 = vsub.s32 2, %v702
    %v704 = vrot.slane %v691, %v703
    %v705 = vlaneseq
    %v706 = vshrl.u32 %v705, 7
    %v707 = vsub.s32 3, %v706
    %v708 = vrot.slane %v691, %v707
    %v709 = vlaneseq
    %v710 = vshrl.u32 %v709, 7
    %v711 = vsub.s32 4, %v710
    %v712 = vrot.slane %v691, %v711
    %v713 = vlaneseq
    %v714 = vshrl.u32 %v713, 7
    %v715 = vsub.s32 5, %v714
    %v716 = vrot.slane %v691, %v715
    %v723 = vmul.f32 %v545, %v696
    %v724 = vmul.f32 %v547, %v700
    %v725 = vmul.f32 %v616, %v704
    %v726 = vmul.f32 %v618, %v708
    %v727 = vmul.f32 %v687, %v712
    %v728 = vmul.f32 %v689, %v716
    %v729 = vadd.f32 %v723, %v724
    %v730 = vadd.f32 %v729, %v725
    %v731 = vadd.f32 %v730, %v726
    %v732 = vadd.f32 %v731, %v727
    %v733 = vadd.f32 %v732, %v728
    %734 = vadd.xlane.f32.xlu0 %v733
    %v735 = vpop.xlane.xlu0 %734
    %v736 = vmul.f32 %v735, 0.001953125
    %v737 = vsub.f32 %v545, %v736
    %v738 = vsub.f32 %v547, %v736
    %v739 = vsub.f32 %v616, %v736
    %v740 = vsub.f32 %v618, %v736
    %v741 = vsub.f32 %v687, %v736
    %v742 = vsub.f32 %v689, %v736
    %v743 = vmul.f32 %v737, %v696
    %v744 = vmul.f32 %v738, %v700
    %v745 = vmul.f32 %v739, %v704
    %v746 = vmul.f32 %v740, %v708
    %v747 = vmul.f32 %v741, %v712
    %v748 = vmul.f32 %v742, %v716
    %v749 = vmul.f32 %v743, %v743
    %v750 = vmul.f32 %v744, %v744
    %v751 = vmul.f32 %v745, %v745
    %v752 = vmul.f32 %v746, %v746
    %v753 = vmul.f32 %v747, %v747
    %v754 = vmul.f32 %v748, %v748
    %v755 = vadd.f32 %v749, %v750
    %v756 = vadd.f32 %v755, %v751
    %v757 = vadd.f32 %v756, %v752
    %v758 = vadd.f32 %v757, %v753
    %v759 = vadd.f32 %v758, %v754
    %760 = vadd.xlane.f32.xlu0 %v759
    %v761 = vpop.xlane.xlu0 %760
    %v762 = vmul.f32 %v761, 0.001953125
    %v763 = vld [vmem:[%s2] sm:$0xff]
    %v764 = vadd.f32 %v762, 1e-05
    %v765 = vrsqrt.pop %v764
    %v766 = vmul.f32 %v763, %v765
    %v767 = vld [vmem:[%s3] sm:$0xff]
    %v768 = vmul.f32 %v736, %v766
    %v769 = vsub.f32 %v767, %v768
    %771 = vset.pattern.permute.xlu0 0
    %772 = vperm.xlu0 %771, %v766
    %v773 = vpop.permute.xlu0 %772
    %v775 = vmul.f32 %v545, %v773
    %v776 = vmul.f32 %v547, %v773
    %v777 = vmul.f32 %v616, %v773
    %v778 = vmul.f32 %v618, %v773
    %v779 = vmul.f32 %v687, %v773
    %v780 = vmul.f32 %v689, %v773
    %782 = vset.pattern.permute.xlu0 0
    %783 = vperm.xlu0 %782, %v769
    %v784 = vpop.permute.xlu0 %783
    %v786 = vadd.f32 %v775, %v784
    %v787 = vadd.f32 %v776, %v784
    %v788 = vadd.f32 %v777, %v784
    %v789 = vadd.f32 %v778, %v784
    %v790 = vadd.f32 %v779, %v784
    %v791 = vadd.f32 %v780, %v784
    %v792 = vmax.f32 %v786, 0.0
    %v793 = vmax.f32 %v787, 0.0
    %v794 = vmax.f32 %v788, 0.0
    %v795 = vmax.f32 %v789, 0.0
    %v796 = vmax.f32 %v790, 0.0
    %v797 = vmax.f32 %v791, 0.0
    %798 = vst [vmem:[#allocation6] sm:$0xff] %v792
    %799 = vst [vmem:[#allocation6 + $0x8] sm:$0xff] %v793
    %800 = vst [vmem:[#allocation6 + $0x10] sm:$0xff] %v794
    %801 = vst [vmem:[#allocation6 + $0x18] sm:$0xff] %v795
    %802 = vst [vmem:[#allocation6 + $0x20] sm:$0xff] %v796
    %803 = vst [vmem:[#allocation6 + $0x28] sm:$0xff] %v797
    // Predicated region
    $region26: #{tpu_custom_call.1} parent=1 // pred_check
      _
    $region27: #{tpu_custom_call.1} parent=1 // pred_check_branch
      %805 = sbr.rel (0) target = $region29
    $region28: #{tpu_custom_call.1} parent=1 // pred_region
      %s807 = ssub.s32 768, 768
      %808 = vsyncadd [#allocation5], %s807
      %s810 = sshll.u32 [#allocation6], 4
      %s811 = int_to_ptr.vmem [resolvable:$true] %s810
      %813 = dma.vmem_to_hbm [thread:$0]  %s811, 768, %s5, [#allocation5]
    $region29: #{tpu_custom_call.1} parent=1 // pred_fallthru
      _
    // Predicated region
    $region30: #{tpu_custom_call.1} parent=1 // pred_check
      _
    $region31: #{tpu_custom_call.1} parent=1 // pred_check_branch
      %815 = sbr.rel (0) target = $region33
    $region32: #{tpu_custom_call.1} parent=1 // pred_region
      %816 = dma.done [#allocation5], 768
    $region33: #{tpu_custom_call.1} parent=1 // pred_fallthru
      _
    %817 = vsyncpa [#allocation4], 1
    %818 = vsyncpa [#allocation5], 1

</llo_original>
